<compile_context>
chip_gen: v6e
topology: v6e:2x2x1
jax: 0.10.0
libtpu: 0.0.40
codegen_flags: <defaults>
</compile_context>

<pallas_src>
import functools

import jax
import jax.numpy as jnp
from jax.experimental import pallas as pl
from jax.experimental.pallas import tpu as pltpu

# class weights from the module: torch.tensor([1/0.9105, 1/0.0895])
W0 = 1.0 / 0.9105
W1 = 1.0 / 0.0895

# ~2 MiB of f32 per class plane per grid step. Per step: 4 class planes +
# targets ~= 10 MiB of HBM traffic, ~20 MiB double-buffered in VMEM.
_TARGET_PLANE_ELEMS = 512 * 1024
_VMEM_LIMIT_BYTES = 48 * 1024 * 1024


def _multitask_loss_kernel(p0_ref, p1_ref, t_ref, lv_ref, out_ref, acc_ref,
                           *, h_total):
    """Blocks: preds (1, 2, TH, W) x2, targets (1, TH, W), out (1, 8, 128).

    Accumulates the weighted numerator / denominator for one batch element n
    in SMEM scalars across the row-tile axis and writes the per-n partial
    (num, den) into a lane-dense output block on the last row tile.
    """
    h = pl.program_id(1)

    @pl.when(h == 0)
    def _init():
        acc_ref[0] = jnp.float32(0.0)   # num: sum w * (p0*nll0 + p1*nll1)
        acc_ref[1] = jnp.float32(0.0)   # den: sum w

    t = t_ref[0]                        # (TH, W), native integer dtype
    th = t.shape[0]

    # Mask rows past the true image height (cdiv grid => partial last block
    # whose trailing buffer rows contain stale/garbage data).
    row = jax.lax.broadcasted_iota(jnp.int32, t.shape, 0)
    valid = (h * th + row) < h_total

    is_cls0 = (t == 0)
    wt = jnp.where(is_cls0, jnp.float32(W0), jnp.float32(W1))
    wt = jnp.where(valid, wt, jnp.float32(0.0))

    def nll(p_ref):
        # 2-class closed form: -log p_t = softplus(x_other - x_t), in the
        # stable form max(z,0) + log(1 + exp(-|z|)).
        # TODO(synk): if a v7x bundle dump shows the EUP slot binding (bf16
        #             preds + 3.2 TB/s HBM), compute the exp/log pair in bf16.
        x0 = p_ref[0, 0].astype(jnp.float32)   # class-0 logits (TH, W)
        x1 = p_ref[0, 1].astype(jnp.float32)   # class-1 logits (TH, W)
        z = jnp.where(is_cls0, x1 - x0, x0 - x1)
        return jnp.maximum(z, 0.0) + jnp.log(1.0 + jnp.exp(-jnp.abs(z)))

    prec0 = jnp.exp(-lv_ref[0])
    prec1 = jnp.exp(-lv_ref[1])
    combined = wt * (prec0 * nll(p0_ref) + prec1 * nll(p1_ref))
    # Re-mask: garbage logits in invalid rows can be inf/NaN and 0*inf = NaN.
    combined = jnp.where(valid, combined, jnp.float32(0.0))

    acc_ref[0] += jnp.sum(combined)
    acc_ref[1] += jnp.sum(wt)

    @pl.when(h == pl.num_programs(1) - 1)
    def _finalize():
        # Lane-dense (8,128) block: num at [0,0], den at [0,1], zeros elsewhere.
        lane = jax.lax.broadcasted_iota(jnp.int32, (8, 128), 1)
        sub = jax.lax.broadcasted_iota(jnp.int32, (8, 128), 0)
        first_row = sub == 0
        vals = jnp.where(first_row & (lane == 0), acc_ref[0], jnp.float32(0.0))
        vals = jnp.where(first_row & (lane == 1), acc_ref[1], vals)
        out_ref[0] = vals


def _pick_row_tile(H, W_padded):
    """Rows per tile: a multiple of 32 (legal sublane granularity for f32,
    bf16 and int8 blocks alike), sized for ~_TARGET_PLANE_ELEMS elements per
    class plane per grid step, never exceeding H. Tiny heights (<32) use one
    full-height block (full-dim blocks are exempt from the sublane rule)."""
    if H < 32:
        return H
    rows = max(32, (_TARGET_PLANE_ELEMS // W_padded) // 32 * 32)
    return min(rows, (H // 32) * 32)


def multitask_loss_vanilla(preds0, preds1, targets, log_vars):
    """preds0 / preds1: [N, 2, H, W] logits (f32 or bf16),
    targets: [N, H, W] integer class ids in {0, 1}, log_vars: [2]."""
    N, C, H, W = preds0.shape
    assert C == 2, "module's class weights imply 2 classes"
    assert preds1.shape == (N, C, H, W)
    assert targets.shape == (N, H, W)

    # Keep targets in their native (narrow) dtype -- no widening pre-pass.
    if not any(targets.dtype == d for d in
               (jnp.int32, jnp.uint32, jnp.int16, jnp.uint16,
                jnp.int8, jnp.uint8, jnp.bool_)):
        targets = targets.astype(jnp.int32)   # e.g. int64 inputs
    lv = log_vars.astype(jnp.float32)

    # Lane-padded width only enters the VMEM budget (blocks span the full W).
    W_padded = pl.cdiv(W, 128) * 128
    TH = _pick_row_tile(H, W_padded)
    grid = (N, pl.cdiv(H, TH))

    p_spec = pl.BlockSpec((1, C, TH, W), lambda n, h: (n, 0, h, 0))
    t_spec = pl.BlockSpec((1, TH, W), lambda n, h: (n, h, 0))
    lv_spec = pl.BlockSpec(memory_space=pltpu.MemorySpace.SMEM)
    out_spec = pl.BlockSpec((1, 8, 128), lambda n, h: (n, 0, 0))

    partials = pl.pallas_call(
        functools.partial(_multitask_loss_kernel, h_total=H),
        out_shape=jax.ShapeDtypeStruct((N, 8, 128), jnp.float32),
        grid=grid,
        in_specs=[p_spec, p_spec, t_spec, lv_spec],
        out_specs=out_spec,
        scratch_shapes=[pltpu.SMEM((2,), jnp.float32)],
        compiler_params=pltpu.CompilerParams(
            # Batch axis parallel (v7x megacore uses both TCs); the row-tile
            # axis carries the per-n accumulator so it stays arbitrary.
            dimension_semantics=("parallel", "arbitrary"),
            vmem_limit_bytes=_VMEM_LIMIT_BYTES),
    )(preds0, preds1, targets, lv)

    # Tiny epilogue: combine the per-n partial (num, den). Both CE terms share
    # the denominator (same targets / class weights), see header.
    num = jnp.sum(partials[:, 0, 0])
    den = jnp.sum(partials[:, 0, 1])
    total = num / den + lv[0] + lv[1]

    # Return log_vars as a device array (the module returns .data.tolist();
    # converting to a Python list here would force a host sync every call).
    return total, lv


if __name__ == "__main__":
    key = jax.random.PRNGKey(0)
    k1, k2, k3 = jax.random.split(key, 3)

    # H=44 is deliberately not a multiple of the 32-row tile, so the
    # cdiv-grid + partial-block row-masking path is exercised.
    N, C, H, W = 2, 2, 44, 128
    preds0 = jax.random.normal(k1, (N, C, H, W), jnp.float32)
    preds1 = jax.random.normal(k2, (N, C, H, W), jnp.float32)
    targets = jax.random.randint(k3, (N, H, W), 0, 2, dtype=jnp.int32)
    # nn.Parameter(torch.zeros(2)) at init; nonzero values exercise the
    # uncertainty-weighting path as well.
    log_vars = jnp.array([0.25, -0.5], jnp.float32)

    total, lv_out = multitask_loss_vanilla(preds0, preds1, targets, log_vars)
    total = jax.block_until_ready(total)

    # pure-JAX reference check
    wvec = jnp.array([W0, W1], jnp.float32)

    def ce_ref(p, t):
        logp = jax.nn.log_softmax(p.astype(jnp.float32), axis=1)
        lt = jnp.take_along_axis(logp, t[:, None, :, :], axis=1)[:, 0]
        wt = wvec[t]
        return jnp.sum(wt * (-lt)) / jnp.sum(wt)

    l0 = ce_ref(preds0, targets)
    l1 = ce_ref(preds1, targets)
    ref = (jnp.exp(-log_vars[0]) * l0 + log_vars[0]
           + jnp.exp(-log_vars[1]) * l1 + log_vars[1])

    assert abs(float(total) - float(ref)) < 5e-4, (float(total), float(ref))
    # host conversion only done here, for the check
    assert [float(v) for v in jax.device_get(lv_out)] == [0.25, -0.5]
    print("KERNEL_OK")
</pallas_src>

<mosaic_0001>
module attributes {stable_mosaic.version = 11 : i64} {
  func.func @_multitask_loss_kernel(%arg0: i32, %arg1: i32, %arg2: memref<1x2x32x128xf32, #tpu.memory_space<vmem>>, %arg3: memref<1x2x32x128xf32, #tpu.memory_space<vmem>>, %arg4: memref<1x32x128xi32, #tpu.memory_space<vmem>>, %arg5: memref<2xf32, #tpu.memory_space<smem>>, %arg6: memref<1x8x128xf32, #tpu.memory_space<vmem>>, %arg7: memref<2xf32, #tpu.memory_space<smem>>) attributes {dimension_semantics = [#tpu.dimension_semantics<parallel>, #tpu.dimension_semantics<arbitrary>], iteration_bounds = array<i64: 2, 2>, scalar_prefetch = 0 : i64, scratch_operands = 1 : i64, tpu.core_type = #tpu.core_type<tc>, window_params = [{transform_indices = @transform_0, window_bounds = array<i64: 1, 2, 32, 128>}, {transform_indices = @transform_1, window_bounds = array<i64: 1, 2, 32, 128>}, {transform_indices = @transform_2, window_bounds = array<i64: 1, 32, 128>}, {transform_indices = @transform_3, window_bounds = array<i64: 2>}, {transform_indices = @transform_4, window_bounds = array<i64: 1, 8, 128>}]} {
    %c0_i32 = arith.constant 0 : i32
    %0 = arith.cmpi eq, %arg1, %c0_i32 : i32
    %1 = arith.extui %0 : i1 to i32
    %c0_i32_0 = arith.constant 0 : i32
    %2 = arith.cmpi ne, %1, %c0_i32_0 : i32
    scf.if %2 {
      %cst_39 = arith.constant 0.000000e+00 : f32
      %c0_40 = arith.constant 0 : index
      %83 = memref.load %arg7[%c0_40] : memref<2xf32, #tpu.memory_space<smem>>
      memref.store %cst_39, %arg7[%c0_40] : memref<2xf32, #tpu.memory_space<smem>>
      %cst_41 = arith.constant 0.000000e+00 : f32
      %c1_42 = arith.constant 1 : index
      %84 = memref.load %arg7[%c1_42] : memref<2xf32, #tpu.memory_space<smem>>
      memref.store %cst_41, %arg7[%c1_42] : memref<2xf32, #tpu.memory_space<smem>>
    } else {
    }
    %c0 = arith.constant 0 : index
    %c0_1 = arith.constant 0 : index
    %c0_2 = arith.constant 0 : index
    %3 = vector.load %arg4[%c0, %c0_1, %c0_2] : memref<1x32x128xi32, #tpu.memory_space<vmem>>, vector<1x32x128xi32>
    %4 = vector.shape_cast %3 : vector<1x32x128xi32> to vector<32x128xi32>
    %5 = tpu.iota {dimensions = array<i32: 0>} : vector<32x128xi32>
    %c32_i32 = arith.constant 32 : i32
    %6 = arith.muli %arg1, %c32_i32 : i32
    %7 = vector.broadcast %6 : i32 to vector<32x128xi32>
    %8 = arith.addi %7, %5 : vector<32x128xi32>
    %c44_i32 = arith.constant 44 : i32
    %9 = vector.broadcast %c44_i32 : i32 to vector<32x128xi32>
    %10 = arith.cmpi slt, %8, %9 : vector<32x128xi32>
    %c0_i32_3 = arith.constant 0 : i32
    %11 = vector.broadcast %c0_i32_3 : i32 to vector<32x128xi32>
    %12 = arith.cmpi eq, %4, %11 : vector<32x128xi32>
    %cst = arith.constant 1.0982976 : f32
    %cst_4 = arith.constant 11.1731844 : f32
    %13 = vector.broadcast %cst : f32 to vector<32x128xf32>
    %14 = vector.broadcast %cst_4 : f32 to vector<32x128xf32>
    %15 = arith.select %12, %13, %14 : vector<32x128xi1>, vector<32x128xf32>
    %cst_5 = arith.constant 0.000000e+00 : f32
    %16 = vector.broadcast %cst_5 : f32 to vector<32x128xf32>
    %17 = arith.select %10, %15, %16 : vector<32x128xi1>, vector<32x128xf32>
    %c0_6 = arith.constant 0 : index
    %18 = memref.load %arg5[%c0_6] : memref<2xf32, #tpu.memory_space<smem>>
    %cst_7 = arith.constant 0.000000e+00 : f32
    %19 = arith.subf %cst_7, %18 : f32
    %20 = math.exp %19 : f32
    %c1 = arith.constant 1 : index
    %21 = memref.load %arg5[%c1] : memref<2xf32, #tpu.memory_space<smem>>
    %cst_8 = arith.constant 0.000000e+00 : f32
    %22 = arith.subf %cst_8, %21 : f32
    %23 = math.exp %22 : f32
    %c0_9 = arith.constant 0 : index
    %c0_10 = arith.constant 0 : index
    %c0_11 = arith.constant 0 : index
    %c0_12 = arith.constant 0 : index
    %24 = vector.load %arg2[%c0_9, %c0_10, %c0_11, %c0_12] : memref<1x2x32x128xf32, #tpu.memory_space<vmem>>, vector<1x1x32x128xf32>
    %25 = vector.shape_cast %24 : vector<1x1x32x128xf32> to vector<32x128xf32>
    %c0_13 = arith.constant 0 : index
    %c1_14 = arith.constant 1 : index
    %c0_15 = arith.constant 0 : index
    %c0_16 = arith.constant 0 : index
    %26 = vector.load %arg2[%c0_13, %c1_14, %c0_15, %c0_16] : memref<1x2x32x128xf32, #tpu.memory_space<vmem>>, vector<1x1x32x128xf32>
    %27 = vector.shape_cast %26 : vector<1x1x32x128xf32> to vector<32x128xf32>
    %28 = arith.subf %27, %25 : vector<32x128xf32>
    %29 = arith.subf %25, %27 : vector<32x128xf32>
    %30 = arith.select %12, %28, %29 : vector<32x128xi1>, vector<32x128xf32>
    %cst_17 = arith.constant 0.000000e+00 : f32
    %31 = vector.broadcast %cst_17 : f32 to vector<32x128xf32>
    %32 = arith.maximumf %30, %31 : vector<32x128xf32>
    %33 = math.absf %30 : vector<32x128xf32>
    %cst_18 = arith.constant 0.000000e+00 : f32
    %34 = vector.broadcast %cst_18 : f32 to vector<32x128xf32>
    %35 = arith.subf %34, %33 : vector<32x128xf32>
    %36 = math.exp %35 : vector<32x128xf32>
    %cst_19 = arith.constant 1.000000e+00 : f32
    %37 = vector.broadcast %cst_19 : f32 to vector<32x128xf32>
    %38 = arith.addf %37, %36 : vector<32x128xf32>
    %39 = math.log %38 : vector<32x128xf32>
    %40 = arith.addf %32, %39 : vector<32x128xf32>
    %41 = vector.broadcast %20 : f32 to vector<32x128xf32>
    %42 = arith.mulf %41, %40 : vector<32x128xf32>
    %c0_20 = arith.constant 0 : index
    %c0_21 = arith.constant 0 : index
    %c0_22 = arith.constant 0 : index
    %c0_23 = arith.constant 0 : index
    %43 = vector.load %arg3[%c0_20, %c0_21, %c0_22, %c0_23] : memref<1x2x32x128xf32, #tpu.memory_space<vmem>>, vector<1x1x32x128xf32>
    %44 = vector.shape_cast %43 : vector<1x1x32x128xf32> to vector<32x128xf32>
    %c0_24 = arith.constant 0 : index
    %c1_25 = arith.constant 1 : index
    %c0_26 = arith.constant 0 : index
    %c0_27 = arith.constant 0 : index
    %45 = vector.load %arg3[%c0_24, %c1_25, %c0_26, %c0_27] : memref<1x2x32x128xf32, #tpu.memory_space<vmem>>, vector<1x1x32x128xf32>
    %46 = vector.shape_cast %45 : vector<1x1x32x128xf32> to vector<32x128xf32>
    %47 = arith.subf %46, %44 : vector<32x128xf32>
    %48 = arith.subf %44, %46 : vector<32x128xf32>
    %49 = arith.select %12, %47, %48 : vector<32x128xi1>, vector<32x128xf32>
    %cst_28 = arith.constant 0.000000e+00 : f32
    %50 = vector.broadcast %cst_28 : f32 to vector<32x128xf32>
    %51 = arith.maximumf %49, %50 : vector<32x128xf32>
    %52 = math.absf %49 : vector<32x128xf32>
    %cst_29 = arith.constant 0.000000e+00 : f32
    %53 = vector.broadcast %cst_29 : f32 to vector<32x128xf32>
    %54 = arith.subf %53, %52 : vector<32x128xf32>
    %55 = math.exp %54 : vector<32x128xf32>
    %cst_30 = arith.constant 1.000000e+00 : f32
    %56 = vector.broadcast %cst_30 : f32 to vector<32x128xf32>
    %57 = arith.addf %56, %55 : vector<32x128xf32>
    %58 = math.log %57 : vector<32x128xf32>
    %59 = arith.addf %51, %58 : vector<32x128xf32>
    %60 = vector.broadcast %23 : f32 to vector<32x128xf32>
    %61 = arith.mulf %60, %59 : vector<32x128xf32>
    %62 = arith.addf %42, %61 : vector<32x128xf32>
    %63 = arith.mulf %17, %62 : vector<32x128xf32>
    %cst_31 = arith.constant 0.000000e+00 : f32
    %64 = vector.broadcast %cst_31 : f32 to vector<32x128xf32>
    %65 = arith.select %10, %63, %64 : vector<32x128xi1>, vector<32x128xf32>
    %c0_32 = arith.constant 0 : index
    %66 = memref.load %arg7[%c0_32] : memref<2xf32, #tpu.memory_space<smem>>
    %67 = vector.shape_cast %65 : vector<32x128xf32> to vector<1x32x128xf32>
    %cst_33 = arith.constant dense<0.000000e+00> : vector<1xf32>
    %68 = vector.multi_reduction <add>, %67, %cst_33 [1, 2] : vector<1x32x128xf32> to vector<1xf32>
    %69 = vector.shape_cast %68 : vector<1xf32> to vector<1x1x1xf32>
    %70 = vector.extract %69[0, 0, 0] : f32 from vector<1x1x1xf32>
    %71 = arith.addf %66, %70 : f32
    %c0_34 = arith.constant 0 : index
    %72 = memref.load %arg7[%c0_34] : memref<2xf32, #tpu.memory_space<smem>>
    memref.store %71, %arg7[%c0_34] : memref<2xf32, #tpu.memory_space<smem>>
    %c1_35 = arith.constant 1 : index
    %73 = memref.load %arg7[%c1_35] : memref<2xf32, #tpu.memory_space<smem>>
    %74 = vector.shape_cast %17 : vector<32x128xf32> to vector<1x32x128xf32>
    %cst_36 = arith.constant dense<0.000000e+00> : vector<1xf32>
    %75 = vector.multi_reduction <add>, %74, %cst_36 [1, 2] : vector<1x32x128xf32> to vector<1xf32>
    %76 = vector.shape_cast %75 : vector<1xf32> to vector<1x1x1xf32>
    %77 = vector.extract %76[0, 0, 0] : f32 from vector<1x1x1xf32>
    %78 = arith.addf %73, %77 : f32
    %c1_37 = arith.constant 1 : index
    %79 = memref.load %arg7[%c1_37] : memref<2xf32, #tpu.memory_space<smem>>
    memref.store %78, %arg7[%c1_37] : memref<2xf32, #tpu.memory_space<smem>>
    %c1_i32 = arith.constant 1 : i32
    %80 = arith.cmpi eq, %arg1, %c1_i32 : i32
    %81 = arith.extui %80 : i1 to i32
    %c0_i32_38 = arith.constant 0 : i32
    %82 = arith.cmpi ne, %81, %c0_i32_38 : i32
    scf.if %82 {
      %83 = tpu.iota {dimensions = array<i32: 1>} : vector<8x128xi32>
      %84 = tpu.iota {dimensions = array<i32: 0>} : vector<8x128xi32>
      %c0_i32_39 = arith.constant 0 : i32
      %85 = vector.broadcast %c0_i32_39 : i32 to vector<8x128xi32>
      %86 = arith.cmpi eq, %84, %85 : vector<8x128xi32>
      %c0_i32_40 = arith.constant 0 : i32
      %87 = vector.broadcast %c0_i32_40 : i32 to vector<8x128xi32>
      %88 = arith.cmpi eq, %83, %87 : vector<8x128xi32>
      %89 = arith.andi %86, %88 : vector<8x128xi1>
      %c0_41 = arith.constant 0 : index
      %90 = memref.load %arg7[%c0_41] : memref<2xf32, #tpu.memory_space<smem>>
      %cst_42 = arith.constant 0.000000e+00 : f32
      %91 = vector.broadcast %90 : f32 to vector<8x128xf32>
      %92 = vector.broadcast %cst_42 : f32 to vector<8x128xf32>
      %93 = arith.select %89, %91, %92 : vector<8x128xi1>, vector<8x128xf32>
      %c1_i32_43 = arith.constant 1 : i32
      %94 = vector.broadcast %c1_i32_43 : i32 to vector<8x128xi32>
      %95 = arith.cmpi eq, %83, %94 : vector<8x128xi32>
      %96 = arith.andi %86, %95 : vector<8x128xi1>
      %c1_44 = arith.constant 1 : index
      %97 = memref.load %arg7[%c1_44] : memref<2xf32, #tpu.memory_space<smem>>
      %98 = vector.broadcast %97 : f32 to vector<8x128xf32>
      %99 = arith.select %96, %98, %93 : vector<8x128xi1>, vector<8x128xf32>
      %c0_45 = arith.constant 0 : index
      %c0_46 = arith.constant 0 : index
      %c0_47 = arith.constant 0 : index
      %100 = vector.load %arg6[%c0_45, %c0_46, %c0_47] : memref<1x8x128xf32, #tpu.memory_space<vmem>>, vector<1x8x128xf32>
      %101 = vector.shape_cast %100 : vector<1x8x128xf32> to vector<8x128xf32>
      %102 = vector.shape_cast %99 : vector<8x128xf32> to vector<1x8x128xf32>
      tpu.vector_store %arg6[%c0_45, %c0_46, %c0_47], %102 {strides = array<i32>} : memref<1x8x128xf32, #tpu.memory_space<vmem>>, vector<1x8x128xf32>,
    } else {
    }
    return
  }
  func.func @transform_0(%arg0: i32, %arg1: i32) -> (i32, i32, i32, i32) {
    %c0_i32 = arith.constant 0 : i32
    %c0_i32_0 = arith.constant 0 : i32
    %c0_i32_1 = arith.constant 0 : i32
    return %arg0, %c0_i32, %arg1, %c0_i32_0 : i32, i32, i32, i32
  }
  func.func @transform_1(%arg0: i32, %arg1: i32) -> (i32, i32, i32, i32) {
    %c0_i32 = arith.constant 0 : i32
    %c0_i32_0 = arith.constant 0 : i32
    %c0_i32_1 = arith.constant 0 : i32
    return %arg0, %c0_i32, %arg1, %c0_i32_0 : i32, i32, i32, i32
  }
  func.func @transform_2(%arg0: i32, %arg1: i32) -> (i32, i32, i32) {
    %c0_i32 = arith.constant 0 : i32
    %c0_i32_0 = arith.constant 0 : i32
    return %arg0, %arg1, %c0_i32 : i32, i32, i32
  }
  func.func @transform_3(%arg0: i32, %arg1: i32) -> i32 {
    %c0_i32 = arith.constant 0 : i32
    %c0_i32_0 = arith.constant 0 : i32
    return %c0_i32 : i32
  }
  func.func @transform_4(%arg0: i32, %arg1: i32) -> (i32, i32, i32) {
    %c0_i32 = arith.constant 0 : i32
    %c0_i32_0 = arith.constant 0 : i32
    %c0_i32_1 = arith.constant 0 : i32
    return %arg0, %c0_i32, %c0_i32_0 : i32, i32, i32
  }
}

</mosaic_0001>

<llo_original>
// kernel: tpu_custom_call.1
$region0: #{tpu_custom_call.1}
  #allocation0 [shape = 'u32[]', space=smem, size = 0x4, offset = 0x4, fixed_abs, tag = 'smem constant byte address 0x4 - core index']
  #allocation1 [shape = 'u32[144,128]{1,0:T(1,128)}', space=vmem, size = 0x12000, scoped, tag = 'internal scratch']
  #allocation2 [shape = 'f32[2]{0:T(128)}', space=smem, size = 0x200, scoped, tag = 'scratch operand']
  %s0 = inlined_call_operand.vmem [shape: f32[2,2,44,128], index: 0, kind: input, shape index: {}]
  %s1 = inlined_call_operand.vmem [shape: f32[2,2,44,128], index: 1, kind: input, shape index: {}]
  %s2 = inlined_call_operand.vmem [shape: s32[2,44,128], index: 2, kind: input, shape index: {}]
  %s3 = inlined_call_operand.vmem [shape: f32[2], index: 3, kind: input, shape index: {}]
  %s4 = inlined_call_operand.hbm [shape: f32[2,8,128], index: 4, kind: output, shape index: {}]
  %s5 = sld [smem:[#allocation0]]
  $region165: #{tpu_custom_call.1} parent=0
    _
  %s7 = ssub.s32 1, %s5
  %s8 = scalar_select 0, %s7, %s5
  $region1: #{tpu_custom_call.1} parent=0
    #allocation3 [shape = 'u8[65536]{0}', space=vmem, size = 0x10000, scoped, tag = 'input window, operand 0']
    #allocation4 [shape = 'u8[65536]{0}', space=vmem, size = 0x10000, scoped, tag = 'input window, operand 1']
    #allocation5 [shape = 'u8[512]{0}', space=smem, size = 0x200, scoped, tag = 'input window, operand 3, single buffered']
    #allocation6 [shape = 's32[2]{0}', space=sflag, size = 0x8, scoped, tag = 'scoped memory for tpu_custom_call.1']
    #allocation7 [shape = 's32[2]{0}', space=sflag, size = 0x8, scoped, tag = 'scoped memory for tpu_custom_call.1']
    #allocation8 [shape = 'u8[8192]{0}', space=vmem, size = 0x2000, scoped, tag = 'output window, operand 0']
    %9 = vsyncpa [#allocation7], 0
    %10 = vsyncpa [#allocation6], 0
    %s11 = scalar_lea.sflag [#allocation6], 1
    %12 = vsyncpa %s11, 0
    loop: start=0, step=1, limit=6
    $region2: #{tpu_custom_call.1} parent=1 // loop_pre_header
      _
    $region3: #{tpu_custom_call.1} parent=1 // loop_header
      %s14 = sphi 0, %s18
      %p15 = scmp.ge.s32.totalorder %s14, 6
      %s21 = sphi 0, %s33
      %s22 = sphi 0, %s29
      %s23 = sphi 0, %s21
      %s24 = sphi 0, %s22
      %s25 = sphi 0, %s23
      %s26 = sphi 0, %s24
      %s38 = sphi 0, %s40
      %s41 = sphi 0, %s38
      %s42 = sphi 0, %s41
      %s58 = sphi 0, %s42
      %s66 = sphi 0, %s68
      %s69 = sphi 0, %s66
      %s70 = sphi 0, %s69
      %s86 = sphi 0, %s70
      %s94 = sphi 0, %s96
      %s97 = sphi 0, %s94
      %s98 = sphi 0, %s97
      %s114 = sphi 0, %s98
      %s118 = sphi 0, %s118
      %s120 = sphi 0, %s118
      %s121 = sphi 0, %s120
      %s135 = sphi 0, %s121
      %s141 = sphi 0, %s143
      %s144 = sphi 0, %s141
      %s145 = sphi 0, %s144
      %s161 = sphi 0, %s145
    $region4: #{tpu_custom_call.1} parent=1 // loop_header_branch
      %17 = sbr.rel (%p15) target = $region8
    $region5: #{tpu_custom_call.1} parent=1 // loop_body
      %s19 = ssub.s32 %s14, 1
      %s20 = ssub.s32 %s14, 2
      %s27 = sadd.s32 1, %s22
      %p28 = scmp.ge.s32.totalorder %s27, 2
      %s29 = scalar_select %p28, 0, %s27
      %s30 = sadd.s32 1, %s21
      %s31 = scalar_select %p28, %s30, %s21
      %p32 = scmp.ge.s32.totalorder %s31, 2
      %s33 = scalar_select %p32, 0, %s31
      %s34 = ssub.s32 %s21, %s33
      %s35 = ssub.s32 %s22, %s29
      %s36 = sor.u32 %s34, %s35
      %p37 = scmp.eq.s32.totalorder %s36, 0
      %s39 = sadd.s32 %s38, 1
      %s40 = scalar_select %p37, %s38, %s39
      %p43 = pneg %p37
      %p44 = scmp.eq.s32.totalorder %s14, 3
      %p45 = por %p43, %p44
      %p46 = scmp.ne.s32.totalorder %s38, %s41
      %p47 = scmp.eq.s32.totalorder %s14, 0
      %p48 = por %p46, %p47
      %p49 = scmp.ne.s32.totalorder %s38, %s41
      %p50 = scmp.eq.s32.totalorder %s19, 3
      %p51 = por %p49, %p50
      %p52 = scmp.ne.s32.totalorder %s41, %s42
      %p53 = scmp.eq.s32.totalorder %s19, 0
      %p54 = por %p52, %p53
      %p55 = scmp.ne.s32.totalorder %s41, %s42
      %p56 = scmp.eq.s32.totalorder %s20, 3
      %p57 = por %p55, %p56
      %p59 = scmp.ne.s32.totalorder %s42, %s58
      %p60 = scmp.eq.s32.totalorder %s20, 0
      %p61 = por %p59, %p60
      %s62 = ssub.s32 %s21, %s33
      %s63 = ssub.s32 %s22, %s29
      %s64 = sor.u32 %s62, %s63
      %p65 = scmp.eq.s32.totalorder %s64, 0
      %s67 = sadd.s32 %s66, 1
      %s68 = scalar_select %p65, %s66, %s67
      %p71 = pneg %p65
      %p72 = scmp.eq.s32.totalorder %s14, 3
      %p73 = por %p71, %p72
      %p74 = scmp.ne.s32.totalorder %s66, %s69
      %p75 = scmp.eq.s32.totalorder %s14, 0
      %p76 = por %p74, %p75
      %p77 = scmp.ne.s32.totalorder %s66, %s69
      %p78 = scmp.eq.s32.totalorder %s19, 3
      %p79 = por %p77, %p78
      %p80 = scmp.ne.s32.totalorder %s69, %s70
      %p81 = scmp.eq.s32.totalorder %s19, 0
      %p82 = por %p80, %p81
      %p83 = scmp.ne.s32.totalorder %s69, %s70
      %p84 = scmp.eq.s32.totalorder %s20, 3
      %p85 = por %p83, %p84
      %p87 = scmp.ne.s32.totalorder %s70, %s86
      %p88 = scmp.eq.s32.totalorder %s20, 0
      %p89 = por %p87, %p88
      %s90 = ssub.s32 %s21, %s33
      %s91 = ssub.s32 %s22, %s29
      %s92 = sor.u32 %s90, %s91
      %p93 = scmp.eq.s32.totalorder %s92, 0
      %s95 = sadd.s32 %s94, 1
      %s96 = scalar_select %p93, %s94, %s95
      %p99 = pneg %p93
      %p100 = scmp.eq.s32.totalorder %s14, 3
      %p101 = por %p99, %p100
      %p102 = scmp.ne.s32.totalorder %s94, %s97
      %p103 = scmp.eq.s32.totalorder %s14, 0
      %p104 = por %p102, %p103
      %p105 = scmp.ne.s32.totalorder %s94, %s97
      %p106 = scmp.eq.s32.totalorder %s19, 3
      %p107 = por %p105, %p106
      %p108 = scmp.ne.s32.totalorder %s97, %s98
      %p109 = scmp.eq.s32.totalorder %s19, 0
      %p110 = por %p108, %p109
      %p111 = scmp.ne.s32.totalorder %s97, %s98
      %p112 = scmp.eq.s32.totalorder %s20, 3
      %p113 = por %p111, %p112
      %p115 = scmp.ne.s32.totalorder %s98, %s114
      %p116 = scmp.eq.s32.totalorder %s20, 0
      %p117 = por %p115, %p116
      %s119 = sadd.s32 %s118, 1
      %p122 = scmp.eq.s32.totalorder %s14, 3
      %p123 = scmp.ne.s32.totalorder %s118, %s120
      %p124 = scmp.eq.s32.totalorder %s14, 0
      %p125 = por %p123, %p124
      %p126 = scmp.ne.s32.totalorder %s118, %s120
      %p127 = scmp.eq.s32.totalorder %s19, 3
      %p128 = por %p126, %p127
      %p129 = scmp.ne.s32.totalorder %s120, %s121
      %p130 = scmp.eq.s32.totalorder %s19, 0
      %p131 = por %p129, %p130
      %p132 = scmp.ne.s32.totalorder %s120, %s121
      %p133 = scmp.eq.s32.totalorder %s20, 3
      %p134 = por %p132, %p133
      %p136 = scmp.ne.s32.totalorder %s121, %s135
      %p137 = scmp.eq.s32.totalorder %s20, 0
      %p138 = por %p136, %p137
      %s139 = ssub.s32 %s21, %s33
      %p140 = scmp.eq.s32.totalorder %s139, 0
      %s142 = sadd.s32 %s141, 1
      %s143 = scalar_select %p140, %s141, %s142
      %p146 = pneg %p140
      %p147 = scmp.eq.s32.totalorder %s14, 3
      %p148 = por %p146, %p147
      %p149 = scmp.ne.s32.totalorder %s141, %s144
      %p150 = scmp.eq.s32.totalorder %s14, 0
      %p151 = por %p149, %p150
      %p152 = scmp.ne.s32.totalorder %s141, %s144
      %p153 = scmp.eq.s32.totalorder %s19, 3
      %p154 = por %p152, %p153
      %p155 = scmp.ne.s32.totalorder %s144, %s145
      %p156 = scmp.eq.s32.totalorder %s19, 0
      %p157 = por %p155, %p156
      %p158 = scmp.ne.s32.totalorder %s144, %s145
      %p159 = scmp.eq.s32.totalorder %s20, 3
      %p160 = por %p158, %p159
      %p162 = scmp.ne.s32.totalorder %s145, %s161
      %p163 = scmp.eq.s32.totalorder %s20, 0
      %p164 = por %p162, %p163
      %p165 = scmp.le.s32.totalorder 1, %s14
      %p166 = scmp.lt.s32.totalorder %s14, 5
      %p167 = pnand %p165, %p166
      %p168 = pneg %p167
      // Predicated region
      $region9: #{tpu_custom_call.1} parent=5 // pred_check
        _
      $region10: #{tpu_custom_call.1} parent=5 // pred_check_branch
        %170 = sbr.rel (%p167) target = $region12
      $region11: #{tpu_custom_call.1} parent=5 // pred_region
        %s171 = ssub.s32 %s14, 1
        // Predicated region
        $region13: #{tpu_custom_call.1} parent=11 // pred_check
          %p172 = pneg %p131
        $region14: #{tpu_custom_call.1} parent=11 // pred_check_branch
          %174 = sbr.rel (%p172) target = $region16
        $region15: #{tpu_custom_call.1} parent=11 // pred_region
          %s176 = ssub.s32 16, 16
          %177 = vsyncadd [#allocation7], %s176
          %s179 = sshll.u32 %s3, 4
          %s180 = int_to_ptr.vmem [resolvable:$true] %s179
          %182 = dma.vmem_to_smem %s180, 16, [#allocation5], [#allocation7]
        $region16: #{tpu_custom_call.1} parent=11 // pred_fallthru
          _
      $region12: #{tpu_custom_call.1} parent=5 // pred_fallthru
        _
      %p183 = scmp.lt.s32.totalorder %s14, 4
      // Predicated region
      $region17: #{tpu_custom_call.1} parent=5 // pred_check
        %p184 = pneg %p183
      $region18: #{tpu_custom_call.1} parent=5 // pred_check_branch
        %186 = sbr.rel (%p184) target = $region20
      $region19: #{tpu_custom_call.1} parent=5 // pred_region
        // Predicated region
        $region21: #{tpu_custom_call.1} parent=19 // pred_check
          %p187 = pneg %p48
        $region22: #{tpu_custom_call.1} parent=19 // pred_check_branch
          %189 = sbr.rel (%p187) target = $region24
        $region23: #{tpu_custom_call.1} parent=19 // pred_region
          %s190 = sand.u32 %s38, 1
          %s191 = sand.u32 %s38, 1
          %s192 = smul.addr %s191, 64
          %s193 = scalar_lea.vmem [#allocation3], %s192
          %s194 = smul.u32 4, %s22
          %s195 = ssub.s32 6, %s194
          %p196 = scmp.lt.s32.totalorder %s195, 4
          %s197 = scalar_select %p196, %s195, 4
          %s198 = smul.u32 256, %s197
          %p199 = scmp.ne.s32.totalorder 0, %s198
          %s200 = smul.addr %s21, 12
          %s201 = sadd.s32 %s194, %s200
          %s202 = smul.addr %s201, 8
          %s203 = scalar_lea.vmem %s0, %s202
          // Predicated region
          $region25: #{tpu_custom_call.1} parent=23 // pred_check
            %p204 = pneg %p199
          $region26: #{tpu_custom_call.1} parent=23 // pred_check_branch
            %206 = sbr.rel (%p204) target = $region28
          $region27: #{tpu_custom_call.1} parent=23 // pred_region
            // Predicated region
            $region29: #{tpu_custom_call.1} parent=27 // pred_check
              _
            $region30: #{tpu_custom_call.1} parent=27 // pred_check_branch
              %208 = sbr.rel (0) target = $region32
            $region31: #{tpu_custom_call.1} parent=27 // pred_region
              // Predicated region
              $region51: #{tpu_custom_call.1} parent=31 // pred_check
                _
              $region52: #{tpu_custom_call.1} parent=31 // pred_check_branch
                %274 = sbr.rel (0) target = $region54
              $region53: #{tpu_custom_call.1} parent=31 // pred_region
                %s275 = sshrl.u32 %s197, 2
                // While loop
                $region55: #{tpu_custom_call.1} parent=53 // loop_pre_header
                  _
                $region56: #{tpu_custom_call.1} parent=53 // loop_header
                  %s277 = sphi 0, %s279
                  %p278 = scmp.ge.s32.totalorder %s277, %s275
                  %s282 = sphi 0, %s303
                  %s283 = sphi %s203, %s306
                  %s284 = sphi %s193, %s307
                $region57: #{tpu_custom_call.1} parent=53 // loop_header_branch
                  %281 = sbr.rel (%p278) target = $region61
                $region58: #{tpu_custom_call.1} parent=53 // loop_body
                  %v285 = vld [vmem:[%s283] sm:$0xff]
                  %286 = vst [vmem:[%s284] sm:$0xff] %v285
                  %v287 = vld [vmem:[%s283 + $0x8] sm:$0xff]
                  %288 = vst [vmem:[%s284 + $0x8] sm:$0xff] %v287
                  %v289 = vld [vmem:[%s283 + $0x10] sm:$0xff]
                  %290 = vst [vmem:[%s284 + $0x10] sm:$0xff] %v289
                  %v291 = vld [vmem:[%s283 + $0x18] sm:$0xff]
                  %292 = vst [vmem:[%s284 + $0x18] sm:$0xff] %v291
                  %v293 = vld [vmem:[%s283 + $0x30] sm:$0xff]
                  %294 = vst [vmem:[%s284 + $0x20] sm:$0xff] %v293
                  %v295 = vld [vmem:[%s283 + $0x38] sm:$0xff]
                  %296 = vst [vmem:[%s284 + $0x28] sm:$0xff] %v295
                  %v297 = vld [vmem:[%s283 + $0x40] sm:$0xff]
                  %298 = vst [vmem:[%s284 + $0x30] sm:$0xff] %v297
                  %v299 = vld [vmem:[%s283 + $0x48] sm:$0xff]
                  %300 = vst [vmem:[%s284 + $0x38] sm:$0xff] %v299
                  %s301 = sadd.s32 1, %s282
                  %p302 = scmp.ge.s32.totalorder %s301, %s275
                  %s303 = scalar_select %p302, 0, %s301
                  %s304 = smul.u32 %s303, 32
                  %s305 = smul.u32 %s303, 32
                  %s306 = scalar_lea.vmem %s203, %s304
                  %s307 = scalar_lea.vmem %s193, %s305 [#allocation3]
                $region59: #{tpu_custom_call.1} parent=53 // loop_footer
                  %s279 = sadd.s32 %s277, 1
                $region60: #{tpu_custom_call.1} parent=53 // loop_footer_branch
                  %276 = sbr.rel target = $region56
                $region61: #{tpu_custom_call.1} parent=53 // loop_exit
                  _
                %s308 = sshrl.u32 %s197, 2
                %s309 = sand.u32 %s197, 3
                %s310 = smul.u32 %s308, 4
                %s311 = smul.u32 8, %s310
                %s312 = scalar_lea.vmem %s203, %s311
                %s313 = smul.u32 8, %s310
                %s314 = scalar_lea.vmem %s193, %s313 [#allocation3]
                // While loop
                $region62: #{tpu_custom_call.1} parent=53 // loop_pre_header
                  _
                $region63: #{tpu_custom_call.1} parent=53 // loop_header
                  %s316 = sphi 0, %s318
                  %p317 = scmp.ge.s32.totalorder %s316, %s309
                  %s321 = sphi 0, %s330
                  %s322 = sphi %s312, %s333
                  %s323 = sphi %s314, %s334
                $region64: #{tpu_custom_call.1} parent=53 // loop_header_branch
                  %320 = sbr.rel (%p317) target = $region68
                $region65: #{tpu_custom_call.1} parent=53 // loop_body
                  %v324 = vld [vmem:[%s322] sm:$0xff]
                  %325 = vst [vmem:[%s323] sm:$0xff] %v324
                  %v326 = vld [vmem:[%s322 + $0x30] sm:$0xff]
                  %327 = vst [vmem:[%s323 + $0x20] sm:$0xff] %v326
                  %s328 = sadd.s32 1, %s321
                  %p329 = scmp.ge.s32.totalorder %s328, %s309
                  %s330 = scalar_select %p329, 0, %s328
                  %s331 = smul.u32 %s330, 8
                  %s332 = smul.u32 %s330, 8
                  %s333 = scalar_lea.vmem %s312, %s331
                  %s334 = scalar_lea.vmem %s314, %s332 [#allocation3]
                $region66: #{tpu_custom_call.1} parent=53 // loop_footer
                  %s318 = sadd.s32 %s316, 1
                $region67: #{tpu_custom_call.1} parent=53 // loop_footer_branch
                  %315 = sbr.rel target = $region63
                $region68: #{tpu_custom_call.1} parent=53 // loop_exit
                  _
              $region54: #{tpu_custom_call.1} parent=31 // pred_fallthru
                _
              // Predicated region
              $region69: #{tpu_custom_call.1} parent=31 // pred_check
                _
              $region70: #{tpu_custom_call.1} parent=31 // pred_check_branch
                %336 = sbr.rel target = $region72
              $region71: #{tpu_custom_call.1} parent=31 // pred_region
                _
              $region72: #{tpu_custom_call.1} parent=31 // pred_fallthru
                _
            $region32: #{tpu_custom_call.1} parent=27 // pred_fallthru
              _
            // Predicated region
            $region33: #{tpu_custom_call.1} parent=27 // pred_check
              _
            $region34: #{tpu_custom_call.1} parent=27 // pred_check_branch
              %210 = sbr.rel target = $region36
            $region35: #{tpu_custom_call.1} parent=27 // pred_region
              %s212 = ssub.s32 256, 1
              %s213 = sshrl.u32 %s197, 2
              // While loop
              $region37: #{tpu_custom_call.1} parent=35 // loop_pre_header
                _
              $region38: #{tpu_custom_call.1} parent=35 // loop_header
                %s215 = sphi 0, %s217
                %p216 = scmp.ge.s32.totalorder %s215, %s213
                %s220 = sphi 0, %s241
                %s221 = sphi %s203, %s244
                %s222 = sphi %s193, %s245
              $region39: #{tpu_custom_call.1} parent=35 // loop_header_branch
                %219 = sbr.rel (%p216) target = $region43
              $region40: #{tpu_custom_call.1} parent=35 // loop_body
                %v223 = vld [vmem:[%s221] sm:%s212]
                %224 = vst [vmem:[%s222] sm:%s212] %v223
                %v225 = vld [vmem:[%s221 + $0x8] sm:%s212]
                %226 = vst [vmem:[%s222 + $0x8] sm:%s212] %v225
                %v227 = vld [vmem:[%s221 + $0x10] sm:%s212]
                %228 = vst [vmem:[%s222 + $0x10] sm:%s212] %v227
                %v229 = vld [vmem:[%s221 + $0x18] sm:%s212]
                %230 = vst [vmem:[%s222 + $0x18] sm:%s212] %v229
                %v231 = vld [vmem:[%s221 + $0x30] sm:%s212]
                %232 = vst [vmem:[%s222 + $0x20] sm:%s212] %v231
                %v233 = vld [vmem:[%s221 + $0x38] sm:%s212]
                %234 = vst [vmem:[%s222 + $0x28] sm:%s212] %v233
                %v235 = vld [vmem:[%s221 + $0x40] sm:%s212]
                %236 = vst [vmem:[%s222 + $0x30] sm:%s212] %v235
                %v237 = vld [vmem:[%s221 + $0x48] sm:%s212]
                %238 = vst [vmem:[%s222 + $0x38] sm:%s212] %v237
                %s239 = sadd.s32 1, %s220
                %p240 = scmp.ge.s32.totalorder %s239, %s213
                %s241 = scalar_select %p240, 0, %s239
                %s242 = smul.u32 %s241, 32
                %s243 = smul.u32 %s241, 32
                %s244 = scalar_lea.vmem %s203, %s242
                %s245 = scalar_lea.vmem %s193, %s243 [#allocation3]
              $region41: #{tpu_custom_call.1} parent=35 // loop_footer
                %s217 = sadd.s32 %s215, 1
              $region42: #{tpu_custom_call.1} parent=35 // loop_footer_branch
                %214 = sbr.rel target = $region38
              $region43: #{tpu_custom_call.1} parent=35 // loop_exit
                _
              %s246 = sshrl.u32 %s197, 2
              %s247 = sand.u32 %s197, 3
              %s248 = smul.u32 %s246, 4
              %s249 = smul.u32 8, %s248
              %s250 = scalar_lea.vmem %s203, %s249
              %s251 = smul.u32 8, %s248
              %s252 = scalar_lea.vmem %s193, %s251 [#allocation3]
              // While loop
              $region44: #{tpu_custom_call.1} parent=35 // loop_pre_header
                _
              $region45: #{tpu_custom_call.1} parent=35 // loop_header
                %s254 = sphi 0, %s256
                %p255 = scmp.ge.s32.totalorder %s254, %s247
                %s259 = sphi 0, %s268
                %s260 = sphi %s250, %s271
                %s261 = sphi %s252, %s272
              $region46: #{tpu_custom_call.1} parent=35 // loop_header_branch
                %258 = sbr.rel (%p255) target = $region50
              $region47: #{tpu_custom_call.1} parent=35 // loop_body
                %v262 = vld [vmem:[%s260] sm:%s212]
                %263 = vst [vmem:[%s261] sm:%s212] %v262
                %v264 = vld [vmem:[%s260 + $0x30] sm:%s212]
                %265 = vst [vmem:[%s261 + $0x20] sm:%s212] %v264
                %s266 = sadd.s32 1, %s259
                %p267 = scmp.ge.s32.totalorder %s266, %s247
                %s268 = scalar_select %p267, 0, %s266
                %s269 = smul.u32 %s268, 8
                %s270 = smul.u32 %s268, 8
                %s271 = scalar_lea.vmem %s250, %s269
                %s272 = scalar_lea.vmem %s252, %s270 [#allocation3]
              $region48: #{tpu_custom_call.1} parent=35 // loop_footer
                %s256 = sadd.s32 %s254, 1
              $region49: #{tpu_custom_call.1} parent=35 // loop_footer_branch
                %253 = sbr.rel target = $region45
              $region50: #{tpu_custom_call.1} parent=35 // loop_exit
                _
            $region36: #{tpu_custom_call.1} parent=27 // pred_fallthru
              _
          $region28: #{tpu_custom_call.1} parent=23 // pred_fallthru
            _
          %337 = vnop
        $region24: #{tpu_custom_call.1} parent=19 // pred_fallthru
          _
        // Predicated region
        $region73: #{tpu_custom_call.1} parent=19 // pred_check
          %p338 = pneg %p76
        $region74: #{tpu_custom_call.1} parent=19 // pred_check_branch
          %340 = sbr.rel (%p338) target = $region76
        $region75: #{tpu_custom_call.1} parent=19 // pred_region
          %s341 = sand.u32 %s66, 1
          %s342 = sand.u32 %s66, 1
          %s343 = smul.addr %s342, 64
          %s344 = scalar_lea.vmem [#allocation4], %s343
          %s345 = smul.u32 4, %s22
          %s346 = ssub.s32 6, %s345
          %p347 = scmp.lt.s32.totalorder %s346, 4
          %s348 = scalar_select %p347, %s346, 4
          %s349 = smul.u32 256, %s348
          %p350 = scmp.ne.s32.totalorder 0, %s349
          %s351 = smul.addr %s21, 12
          %s352 = sadd.s32 %s345, %s351
          %s353 = smul.addr %s352, 8
          %s354 = scalar_lea.vmem %s1, %s353
          // Predicated region
          $region77: #{tpu_custom_call.1} parent=75 // pred_check
            %p355 = pneg %p350
          $region78: #{tpu_custom_call.1} parent=75 // pred_check_branch
            %357 = sbr.rel (%p355) target = $region80
          $region79: #{tpu_custom_call.1} parent=75 // pred_region
            // Predicated region
            $region81: #{tpu_custom_call.1} parent=79 // pred_check
              _
            $region82: #{tpu_custom_call.1} parent=79 // pred_check_branch
              %359 = sbr.rel (0) target = $region84
            $region83: #{tpu_custom_call.1} parent=79 // pred_region
              // Predicated region
              $region103: #{tpu_custom_call.1} parent=83 // pred_check
                _
              $region104: #{tpu_custom_call.1} parent=83 // pred_check_branch
                %425 = sbr.rel (0) target = $region106
              $region105: #{tpu_custom_call.1} parent=83 // pred_region
                %s426 = sshrl.u32 %s348, 2
                // While loop
                $region107: #{tpu_custom_call.1} parent=105 // loop_pre_header
                  _
                $region108: #{tpu_custom_call.1} parent=105 // loop_header
                  %s428 = sphi 0, %s430
                  %p429 = scmp.ge.s32.totalorder %s428, %s426
                  %s433 = sphi 0, %s454
                  %s434 = sphi %s354, %s457
                  %s435 = sphi %s344, %s458
                $region109: #{tpu_custom_call.1} parent=105 // loop_header_branch
                  %432 = sbr.rel (%p429) target = $region113
                $region110: #{tpu_custom_call.1} parent=105 // loop_body
                  %v436 = vld [vmem:[%s434] sm:$0xff]
                  %437 = vst [vmem:[%s435] sm:$0xff] %v436
                  %v438 = vld [vmem:[%s434 + $0x8] sm:$0xff]
                  %439 = vst [vmem:[%s435 + $0x8] sm:$0xff] %v438
                  %v440 = vld [vmem:[%s434 + $0x10] sm:$0xff]
                  %441 = vst [vmem:[%s435 + $0x10] sm:$0xff] %v440
                  %v442 = vld [vmem:[%s434 + $0x18] sm:$0xff]
                  %443 = vst [vmem:[%s435 + $0x18] sm:$0xff] %v442
                  %v444 = vld [vmem:[%s434 + $0x30] sm:$0xff]
                  %445 = vst [vmem:[%s435 + $0x20] sm:$0xff] %v444
                  %v446 = vld [vmem:[%s434 + $0x38] sm:$0xff]
                  %447 = vst [vmem:[%s435 + $0x28] sm:$0xff] %v446
                  %v448 = vld [vmem:[%s434 + $0x40] sm:$0xff]
                  %449 = vst [vmem:[%s435 + $0x30] sm:$0xff] %v448
                  %v450 = vld [vmem:[%s434 + $0x48] sm:$0xff]
                  %451 = vst [vmem:[%s435 + $0x38] sm:$0xff] %v450
                  %s452 = sadd.s32 1, %s433
                  %p453 = scmp.ge.s32.totalorder %s452, %s426
                  %s454 = scalar_select %p453, 0, %s452
                  %s455 = smul.u32 %s454, 32
                  %s456 = smul.u32 %s454, 32
                  %s457 = scalar_lea.vmem %s354, %s455
                  %s458 = scalar_lea.vmem %s344, %s456 [#allocation4]
                $region111: #{tpu_custom_call.1} parent=105 // loop_footer
                  %s430 = sadd.s32 %s428, 1
                $region112: #{tpu_custom_call.1} parent=105 // loop_footer_branch
                  %427 = sbr.rel target = $region108
                $region113: #{tpu_custom_call.1} parent=105 // loop_exit
                  _
                %s459 = sshrl.u32 %s348, 2
                %s460 = sand.u32 %s348, 3
                %s461 = smul.u32 %s459, 4
                %s462 = smul.u32 8, %s461
                %s463 = scalar_lea.vmem %s354, %s462
                %s464 = smul.u32 8, %s461
                %s465 = scalar_lea.vmem %s344, %s464 [#allocation4]
                // While loop
                $region114: #{tpu_custom_call.1} parent=105 // loop_pre_header
                  _
                $region115: #{tpu_custom_call.1} parent=105 // loop_header
                  %s467 = sphi 0, %s469
                  %p468 = scmp.ge.s32.totalorder %s467, %s460
                  %s472 = sphi 0, %s481
                  %s473 = sphi %s463, %s484
                  %s474 = sphi %s465, %s485
                $region116: #{tpu_custom_call.1} parent=105 // loop_header_branch
                  %471 = sbr.rel (%p468) target = $region120
                $region117: #{tpu_custom_call.1} parent=105 // loop_body
                  %v475 = vld [vmem:[%s473] sm:$0xff]
                  %476 = vst [vmem:[%s474] sm:$0xff] %v475
                  %v477 = vld [vmem:[%s473 + $0x30] sm:$0xff]
                  %478 = vst [vmem:[%s474 + $0x20] sm:$0xff] %v477
                  %s479 = sadd.s32 1, %s472
                  %p480 = scmp.ge.s32.totalorder %s479, %s460
                  %s481 = scalar_select %p480, 0, %s479
                  %s482 = smul.u32 %s481, 8
                  %s483 = smul.u32 %s481, 8
                  %s484 = scalar_lea.vmem %s463, %s482
                  %s485 = scalar_lea.vmem %s465, %s483 [#allocation4]
                $region118: #{tpu_custom_call.1} parent=105 // loop_footer
                  %s469 = sadd.s32 %s467, 1
                $region119: #{tpu_custom_call.1} parent=105 // loop_footer_branch
                  %466 = sbr.rel target = $region115
                $region120: #{tpu_custom_call.1} parent=105 // loop_exit
                  _
              $region106: #{tpu_custom_call.1} parent=83 // pred_fallthru
                _
              // Predicated region
              $region121: #{tpu_custom_call.1} parent=83 // pred_check
                _
              $region122: #{tpu_custom_call.1} parent=83 // pred_check_branch
                %487 = sbr.rel target = $region124
              $region123: #{tpu_custom_call.1} parent=83 // pred_region
                _
              $region124: #{tpu_custom_call.1} parent=83 // pred_fallthru
                _
            $region84: #{tpu_custom_call.1} parent=79 // pred_fallthru
              _
            // Predicated region
            $region85: #{tpu_custom_call.1} parent=79 // pred_check
              _
            $region86: #{tpu_custom_call.1} parent=79 // pred_check_branch
              %361 = sbr.rel target = $region88
            $region87: #{tpu_custom_call.1} parent=79 // pred_region
              %s363 = ssub.s32 256, 1
              %s364 = sshrl.u32 %s348, 2
              // While loop
              $region89: #{tpu_custom_call.1} parent=87 // loop_pre_header
                _
              $region90: #{tpu_custom_call.1} parent=87 // loop_header
                %s366 = sphi 0, %s368
                %p367 = scmp.ge.s32.totalorder %s366, %s364
                %s371 = sphi 0, %s392
                %s372 = sphi %s354, %s395
                %s373 = sphi %s344, %s396
              $region91: #{tpu_custom_call.1} parent=87 // loop_header_branch
                %370 = sbr.rel (%p367) target = $region95
              $region92: #{tpu_custom_call.1} parent=87 // loop_body
                %v374 = vld [vmem:[%s372] sm:%s363]
                %375 = vst [vmem:[%s373] sm:%s363] %v374
                %v376 = vld [vmem:[%s372 + $0x8] sm:%s363]
                %377 = vst [vmem:[%s373 + $0x8] sm:%s363] %v376
                %v378 = vld [vmem:[%s372 + $0x10] sm:%s363]
                %379 = vst [vmem:[%s373 + $0x10] sm:%s363] %v378
                %v380 = vld [vmem:[%s372 + $0x18] sm:%s363]
                %381 = vst [vmem:[%s373 + $0x18] sm:%s363] %v380
                %v382 = vld [vmem:[%s372 + $0x30] sm:%s363]
                %383 = vst [vmem:[%s373 + $0x20] sm:%s363] %v382
                %v384 = vld [vmem:[%s372 + $0x38] sm:%s363]
                %385 = vst [vmem:[%s373 + $0x28] sm:%s363] %v384
                %v386 = vld [vmem:[%s372 + $0x40] sm:%s363]
                %387 = vst [vmem:[%s373 + $0x30] sm:%s363] %v386
                %v388 = vld [vmem:[%s372 + $0x48] sm:%s363]
                %389 = vst [vmem:[%s373 + $0x38] sm:%s363] %v388
                %s390 = sadd.s32 1, %s371
                %p391 = scmp.ge.s32.totalorder %s390, %s364
                %s392 = scalar_select %p391, 0, %s390
                %s393 = smul.u32 %s392, 32
                %s394 = smul.u32 %s392, 32
                %s395 = scalar_lea.vmem %s354, %s393
                %s396 = scalar_lea.vmem %s344, %s394 [#allocation4]
              $region93: #{tpu_custom_call.1} parent=87 // loop_footer
                %s368 = sadd.s32 %s366, 1
              $region94: #{tpu_custom_call.1} parent=87 // loop_footer_branch
                %365 = sbr.rel target = $region90
              $region95: #{tpu_custom_call.1} parent=87 // loop_exit
                _
              %s397 = sshrl.u32 %s348, 2
              %s398 = sand.u32 %s348, 3
              %s399 = smul.u32 %s397, 4
              %s400 = smul.u32 8, %s399
              %s401 = scalar_lea.vmem %s354, %s400
              %s402 = smul.u32 8, %s399
              %s403 = scalar_lea.vmem %s344, %s402 [#allocation4]
              // While loop
              $region96: #{tpu_custom_call.1} parent=87 // loop_pre_header
                _
              $region97: #{tpu_custom_call.1} parent=87 // loop_header
                %s405 = sphi 0, %s407
                %p406 = scmp.ge.s32.totalorder %s405, %s398
                %s410 = sphi 0, %s419
                %s411 = sphi %s401, %s422
                %s412 = sphi %s403, %s423
              $region98: #{tpu_custom_call.1} parent=87 // loop_header_branch
                %409 = sbr.rel (%p406) target = $region102
              $region99: #{tpu_custom_call.1} parent=87 // loop_body
                %v413 = vld [vmem:[%s411] sm:%s363]
                %414 = vst [vmem:[%s412] sm:%s363] %v413
                %v415 = vld [vmem:[%s411 + $0x30] sm:%s363]
                %416 = vst [vmem:[%s412 + $0x20] sm:%s363] %v415
                %s417 = sadd.s32 1, %s410
                %p418 = scmp.ge.s32.totalorder %s417, %s398
                %s419 = scalar_select %p418, 0, %s417
                %s420 = smul.u32 %s419, 8
                %s421 = smul.u32 %s419, 8
                %s422 = scalar_lea.vmem %s401, %s420
                %s423 = scalar_lea.vmem %s403, %s421 [#allocation4]
              $region100: #{tpu_custom_call.1} parent=87 // loop_footer
                %s407 = sadd.s32 %s405, 1
              $region101: #{tpu_custom_call.1} parent=87 // loop_footer_branch
                %404 = sbr.rel target = $region97
              $region102: #{tpu_custom_call.1} parent=87 // loop_exit
                _
            $region88: #{tpu_custom_call.1} parent=79 // pred_fallthru
              _
          $region80: #{tpu_custom_call.1} parent=75 // pred_fallthru
            _
          %488 = vnop
        $region76: #{tpu_custom_call.1} parent=19 // pred_fallthru
          _
        // Predicated region
        $region125: #{tpu_custom_call.1} parent=19 // pred_check
          %p489 = pneg %p104
        $region126: #{tpu_custom_call.1} parent=19 // pred_check_branch
          %491 = sbr.rel (%p489) target = $region128
        $region127: #{tpu_custom_call.1} parent=19 // pred_region
          %s492 = smul.u32 4, %s22
          %s493 = ssub.s32 6, %s492
          %p494 = scmp.lt.s32.totalorder %s493, 4
          %s495 = scalar_select %p494, %s493, 4
          %s496 = smul.u32 128, %s495
          %p497 = scmp.lt.s32.totalorder %s21, 1
          %s498 = scalar_select %p497, %s21, 1
          %p499 = scmp.lt.s32.totalorder %s492, 5
          %s500 = scalar_select %p499, %s492, 5
          %s501 = smul.addr %s498, 6
          %s502 = sadd.s32 %s500, %s501
          %s503 = smul.addr %s502, 8
          %s504 = scalar_lea.vmem %s2, %s503
          %s505 = smul.u32 4, %s22
          %s506 = ssub.s32 6, %s505
          %p507 = scmp.lt.s32.totalorder %s506, 4
          %s508 = scalar_select %p507, %s506, 4
          %s509 = smul.u32 128, %s508
        $region128: #{tpu_custom_call.1} parent=19 // pred_fallthru
          _
      $region20: #{tpu_custom_call.1} parent=5 // pred_fallthru
        _
      %p510 = scmp.le.s32.totalorder 1, %s14
      %p511 = scmp.lt.s32.totalorder %s14, 5
      %p512 = pnand %p510, %p511
      %p513 = pneg %p512
      // Predicated region
      $region129: #{tpu_custom_call.1} parent=5 // pred_check
        _
      $region130: #{tpu_custom_call.1} parent=5 // pred_check_branch
        %515 = sbr.rel (%p512) target = $region132
      $region131: #{tpu_custom_call.1} parent=5 // pred_region
        %s516 = ssub.s32 %s14, 1
        %s517 = sand.u32 %s41, 1
        %s518 = sand.u32 %s41, 1
        %s519 = smul.addr %s518, 64
        %s520 = scalar_lea.vmem [#allocation3], %s519
        // Predicated region
        $region133: #{tpu_custom_call.1} parent=131 // pred_check
          %p521 = pneg %p54
        $region134: #{tpu_custom_call.1} parent=131 // pred_check_branch
          %523 = sbr.rel (%p521) target = $region136
        $region135: #{tpu_custom_call.1} parent=131 // pred_region
          _
        $region136: #{tpu_custom_call.1} parent=131 // pred_fallthru
          _
        %s524 = sand.u32 %s69, 1
        %s525 = sand.u32 %s69, 1
        %s526 = smul.addr %s525, 64
        %s527 = scalar_lea.vmem [#allocation4], %s526
        // Predicated region
        $region137: #{tpu_custom_call.1} parent=131 // pred_check
          %p528 = pneg %p82
        $region138: #{tpu_custom_call.1} parent=131 // pred_check_branch
          %530 = sbr.rel (%p528) target = $region140
        $region139: #{tpu_custom_call.1} parent=131 // pred_region
          _
        $region140: #{tpu_custom_call.1} parent=131 // pred_fallthru
          _
        // Predicated region
        $region141: #{tpu_custom_call.1} parent=131 // pred_check
          %p531 = pneg %p131
        $region142: #{tpu_custom_call.1} parent=131 // pred_check_branch
          %533 = sbr.rel (%p531) target = $region144
        $region143: #{tpu_custom_call.1} parent=131 // pred_region
          %534 = dma.done [#allocation7], 16
        $region144: #{tpu_custom_call.1} parent=131 // pred_fallthru
          _
        %535 = sfence
        %s536 = sand.u32 %s41, 1
        %s537 = sand.u32 %s41, 1
        %s538 = smul.addr %s537, 64
        %s539 = scalar_lea.vmem [#allocation3], %s538
        %p540 = pneg %p54
        %p541 = pneg %p51
        %s542 = sand.u32 %s69, 1
        %s543 = sand.u32 %s69, 1
        %s544 = smul.addr %s543, 64
        %s545 = scalar_lea.vmem [#allocation4], %s544
        %p546 = pneg %p82
        %p547 = pneg %p79
        %s548 = smul.u32 4, %s24
        %s549 = ssub.s32 6, %s548
        %p550 = scmp.lt.s32.totalorder %s549, 4
        %s551 = scalar_select %p550, %s549, 4
        %s552 = smul.u32 128, %s551
        %p553 = scmp.lt.s32.totalorder %s23, 1
        %s554 = scalar_select %p553, %s23, 1
        %p555 = scmp.lt.s32.totalorder %s548, 5
        %s556 = scalar_select %p555, %s548, 5
        %s557 = smul.addr %s554, 6
        %s558 = sadd.s32 %s556, %s557
        %s559 = smul.addr %s558, 8
        %s560 = scalar_lea.vmem %s2, %s559
        %p561 = pneg %p110
        %p562 = pneg %p107
        %p563 = pneg %p131
        %p564 = pneg %p128
        %p565 = pneg %p157
        %p566 = pneg %p154
        %s567 = sand.u32 %s144, 1
        %s568 = scalar_lea.sflag [#allocation6], %s567
        %s569 = sand.u32 %s144, 1
        %s570 = smul.addr %s569, 8
        %s571 = scalar_lea.vmem [#allocation8], %s570
        %s572 = smul.u32 4, %s24
        %s573 = ssub.s32 6, %s572
        %p574 = scmp.lt.s32.totalorder %s573, 4
        %s575 = scalar_select %p574, %s573, 4
        %s576 = smul.u32 256, %s575
        %s577 = smul.u32 4, %s24
        %s578 = ssub.s32 6, %s577
        %p579 = scmp.lt.s32.totalorder %s578, 4
        %s580 = scalar_select %p579, %s578, 4
        %s581 = smul.u32 256, %s580
        %s582 = smul.u32 4, %s24
        %s583 = ssub.s32 6, %s582
        %p584 = scmp.lt.s32.totalorder %s583, 4
        %s585 = scalar_select %p584, %s583, 4
        %s586 = smul.u32 128, %s585
        %p587 = scmp.lt.s32.totalorder %s23, 1
        %s588 = scalar_select %p587, %s23, 1
        %p589 = scmp.lt.s32.totalorder %s582, 5
        %s590 = scalar_select %p589, %s582, 5
        %s591 = smul.addr %s588, 6
        %s592 = sadd.s32 %s590, %s591
        %s593 = smul.addr %s592, 8
        %s594 = scalar_lea.vmem %s2, %s593
        %s595 = smul.u32 4, %s24
        %s596 = ssub.s32 6, %s595
        %p597 = scmp.lt.s32.totalorder %s596, 4
        %s598 = scalar_select %p597, %s596, 4
        %s599 = smul.u32 128, %s598
        %p600 = scmp.eq.s32.totalorder %s24, 0
        // Predicated region
        $region145: #{tpu_custom_call.1} parent=131 // pred_check
          %p601 = pneg %p600
        $region146: #{tpu_custom_call.1} parent=131 // pred_check_branch
          %603 = sbr.rel (%p601) target = $region148
        $region147: #{tpu_custom_call.1} parent=131 // pred_region
          %s604 = scalar_lea.smem [#allocation2], 0
          %605 = sst [smem:[%s604]] 0.0
          %s606 = scalar_lea.smem [#allocation2], 1
          %607 = sst [smem:[%s606]] 0.0
        $region148: #{tpu_custom_call.1} parent=131 // pred_fallthru
          _
        %v608 = vld [vmem:[%s594] sm:$0xff]
        %v609 = vld [vmem:[%s594 + $0x8] sm:$0xff]
        %v610 = vld [vmem:[%s594 + $0x10] sm:$0xff]
        %v611 = vld [vmem:[%s594 + $0x18] sm:$0xff]
        %v612 = vlaneseq
        %v613 = vshrl.u32 %v612, 7
        %v614 = vadd.s32 %v613, 8
        %v615 = vadd.s32 %v613, 16
        %v616 = vadd.s32 %v613, 24
        %s617 = smul.u32 %s24, 32
        %v618 = vstv %s617
        %v619 = vadd.s32 %v618, %v613
        %v620 = vadd.s32 %v618, %v614
        %v621 = vadd.s32 %v618, %v615
        %v622 = vadd.s32 %v618, %v616
        %vm623 = vcmp.lt.s32.totalorder %v619, 44
        %vm624 = vcmp.lt.s32.totalorder %v620, 44
        %vm625 = vcmp.lt.s32.totalorder %v621, 44
        %vm626 = vcmp.lt.s32.totalorder %v622, 44
        %vm627 = vcmp.eq.s32.totalorder %v608, 0
        %vm628 = vcmp.eq.s32.totalorder %v609, 0
        %vm629 = vcmp.eq.s32.totalorder %v610, 0
        %vm630 = vcmp.eq.s32.totalorder %v611, 0
        %v631 = vsel %vm627, 1.0982976, 11.173184
        %v632 = vsel %vm628, 1.0982976, 11.173184
        %v633 = vsel %vm629, 1.0982976, 11.173184
        %v634 = vsel %vm630, 1.0982976, 11.173184
        %v635 = vsel %vm623, %v631, 0.0
        %v636 = vsel %vm624, %v632, 0.0
        %v637 = vsel %vm625, %v633, 0.0
        %v638 = vsel %vm626, %v634, 0.0
        %s639 = sld [smem:[#allocation5]]
        %s640 = ssub.f32 0.0, %s639
        %v641 = vstv %s640
        %v642 = vmul.f32 %v641, 1.442695
        %v643 = vpow.pop %v642
        %s644 = vtos %v643
        %s645 = sld [smem:[#allocation5 + $0x1]]
        %s646 = ssub.f32 0.0, %s645
        %v647 = vstv %s646
        %v648 = vmul.f32 %v647, 1.442695
        %v649 = vpow.pop %v648
        %s650 = vtos %v649
        %v651 = vld [vmem:[%s520] sm:$0xff]
        %v652 = vld [vmem:[%s520 + $0x8] sm:$0xff]
        %v653 = vld [vmem:[%s520 + $0x10] sm:$0xff]
        %v654 = vld [vmem:[%s520 + $0x18] sm:$0xff]
        %s655 = scalar_lea.vmem %s520, 32 [#allocation3]
        %v656 = vld [vmem:[%s655] sm:$0xff]
        %v657 = vld [vmem:[%s655 + $0x8] sm:$0xff]
        %v658 = vld [vmem:[%s655 + $0x10] sm:$0xff]
        %v659 = vld [vmem:[%s655 + $0x18] sm:$0xff]
        %v660 = vsub.f32 %v656, %v651
        %v661 = vsub.f32 %v657, %v652
        %v662 = vsub.f32 %v658, %v653
        %v663 = vsub.f32 %v659, %v654
        %v664 = vsub.f32 %v651, %v656
        %v665 = vsub.f32 %v652, %v657
        %v666 = vsub.f32 %v653, %v658
        %v667 = vsub.f32 %v654, %v659
        %v668 = vsel %vm627, %v660, %v664
        %v669 = vsel %vm628, %v661, %v665
        %v670 = vsel %vm629, %v662, %v666
        %v671 = vsel %vm630, %v663, %v667
        %v672 = vmax.f32 %v668, 0.0
        %v673 = vmax.f32 %v669, 0.0
        %v674 = vmax.f32 %v670, 0.0
        %v675 = vmax.f32 %v671, 0.0
        %v676 = vand.u32 2147483647, %v668
        %v677 = vand.u32 2147483647, %v669
        %v678 = vand.u32 2147483647, %v670
        %v679 = vand.u32 2147483647, %v671
        %v680 = vsub.f32 0.0, %v676
        %v681 = vsub.f32 0.0, %v677
        %v682 = vsub.f32 0.0, %v678
        %v683 = vsub.f32 0.0, %v679
        %v684 = vmul.f32 %v680, 1.442695
        %v685 = vpow.pop %v684
        %v686 = vmul.f32 %v681, 1.442695
        %v687 = vpow.pop %v686
        %v688 = vmul.f32 %v682, 1.442695
        %v689 = vpow.pop %v688
        %v690 = vmul.f32 %v683, 1.442695
        %v691 = vpow.pop %v690
        %v692 = vadd.f32 %v685, 1.0
        %v693 = vadd.f32 %v687, 1.0
        %v694 = vadd.f32 %v689, 1.0
        %v695 = vadd.f32 %v691, 1.0
        %v696 = vlog2.pop %v692
        %v697 = vmul.f32 %v696, 0.6931472
        %v698 = vlog2.pop %v693
        %v699 = vmul.f32 %v698, 0.6931472
        %v700 = vlog2.pop %v694
        %v701 = vmul.f32 %v700, 0.6931472
        %v702 = vlog2.pop %v695
        %v703 = vmul.f32 %v702, 0.6931472
        %v704 = vadd.f32 %v672, %v697
        %v705 = vadd.f32 %v673, %v699
        %v706 = vadd.f32 %v674, %v701
        %v707 = vadd.f32 %v675, %v703
        %v708 = vstv %s644
        %v709 = vmul.f32 %v708, %v704
        %v710 = vmul.f32 %v708, %v705
        %v711 = vmul.f32 %v708, %v706
        %v712 = vmul.f32 %v708, %v707
        %v713 = vld [vmem:[%s527] sm:$0xff]
        %v714 = vld [vmem:[%s527 + $0x8] sm:$0xff]
        %v715 = vld [vmem:[%s527 + $0x10] sm:$0xff]
        %v716 = vld [vmem:[%s527 + $0x18] sm:$0xff]
        %s717 = scalar_lea.vmem %s527, 32 [#allocation4]
        %v718 = vld [vmem:[%s717] sm:$0xff]
        %v719 = vld [vmem:[%s717 + $0x8] sm:$0xff]
        %v720 = vld [vmem:[%s717 + $0x10] sm:$0xff]
        %v721 = vld [vmem:[%s717 + $0x18] sm:$0xff]
        %v722 = vsub.f32 %v718, %v713
        %v723 = vsub.f32 %v719, %v714
        %v724 = vsub.f32 %v720, %v715
        %v725 = vsub.f32 %v721, %v716
        %v726 = vsub.f32 %v713, %v718
        %v727 = vsub.f32 %v714, %v719
        %v728 = vsub.f32 %v715, %v720
        %v729 = vsub.f32 %v716, %v721
        %v730 = vsel %vm627, %v722, %v726
        %v731 = vsel %vm628, %v723, %v727
        %v732 = vsel %vm629, %v724, %v728
        %v733 = vsel %vm630, %v725, %v729
        %v734 = vmax.f32 %v730, 0.0
        %v735 = vmax.f32 %v731, 0.0
        %v736 = vmax.f32 %v732, 0.0
        %v737 = vmax.f32 %v733, 0.0
        %v738 = vand.u32 2147483647, %v730
        %v739 = vand.u32 2147483647, %v731
        %v740 = vand.u32 2147483647, %v732
        %v741 = vand.u32 2147483647, %v733
        %v742 = vsub.f32 0.0, %v738
        %v743 = vsub.f32 0.0, %v739
        %v744 = vsub.f32 0.0, %v740
        %v745 = vsub.f32 0.0, %v741
        %v746 = vmul.f32 %v742, 1.442695
        %v747 = vpow.pop %v746
        %v748 = vmul.f32 %v743, 1.442695
        %v749 = vpow.pop %v748
        %v750 = vmul.f32 %v744, 1.442695
        %v751 = vpow.pop %v750
        %v752 = vmul.f32 %v745, 1.442695
        %v753 = vpow.pop %v752
        %v754 = vadd.f32 %v747, 1.0
        %v755 = vadd.f32 %v749, 1.0
        %v756 = vadd.f32 %v751, 1.0
        %v757 = vadd.f32 %v753, 1.0
        %v758 = vlog2.pop %v754
        %v759 = vmul.f32 %v758, 0.6931472
        %v760 = vlog2.pop %v755
        %v761 = vmul.f32 %v760, 0.6931472
        %v762 = vlog2.pop %v756
        %v763 = vmul.f32 %v762, 0.6931472
        %v764 = vlog2.pop %v757
        %v765 = vmul.f32 %v764, 0.6931472
        %v766 = vadd.f32 %v734, %v759
        %v767 = vadd.f32 %v735, %v761
        %v768 = vadd.f32 %v736, %v763
        %v769 = vadd.f32 %v737, %v765
        %v770 = vstv %s650
        %v771 = vmul.f32 %v770, %v766
        %v772 = vmul.f32 %v770, %v767
        %v773 = vmul.f32 %v770, %v768
        %v774 = vmul.f32 %v770, %v769
        %v775 = vadd.f32 %v709, %v771
        %v776 = vadd.f32 %v710, %v772
        %v777 = vadd.f32 %v711, %v773
        %v778 = vadd.f32 %v712, %v774
        %v779 = vmul.f32 %v635, %v775
        %v780 = vmul.f32 %v636, %v776
        %v781 = vmul.f32 %v637, %v777
        %v782 = vmul.f32 %v638, %v778
        %v783 = vsel %vm623, %v779, 0.0
        %v784 = vsel %vm624, %v780, 0.0
        %v785 = vsel %vm625, %v781, 0.0
        %v786 = vsel %vm626, %v782, 0.0
        %s787 = sld [smem:[#allocation2]]
        %v788 = vadd.f32 %v783, %v784
        %v789 = vadd.f32 %v788, %v785
        %v790 = vadd.f32 %v789, %v786
        %791 = vadd.xlane.f32.xlu0 %v790
        %v792 = vpop.xlane.xlu0 %791
        %v793 = vrot.slane %v792, 4
        %v794 = vadd.f32 %v792, %v793
        %v795 = vrot.slane %v794, 2
        %v796 = vadd.f32 %v794, %v795
        %v797 = vrot.slane %v796, 1
        %v798 = vadd.f32 %v796, %v797
        %s799 = vtos %v798
        %s800 = sadd.f32 %s787, %s799
        %s801 = scalar_lea.smem [#allocation2], 0
        %802 = sst [smem:[%s801]] %s800
        %s803 = sld [smem:[#allocation2 + $0x1]]
        %v804 = vadd.f32 %v635, %v636
        %v805 = vadd.f32 %v804, %v637
        %v806 = vadd.f32 %v805, %v638
        %807 = vadd.xlane.f32.xlu0 %v806
        %v808 = vpop.xlane.xlu0 %807
        %v809 = vrot.slane %v808, 4
        %v810 = vadd.f32 %v808, %v809
        %v811 = vrot.slane %v810, 2
        %v812 = vadd.f32 %v810, %v811
        %v813 = vrot.slane %v812, 1
        %v814 = vadd.f32 %v812, %v813
        %s815 = vtos %v814
        %s816 = sadd.f32 %s803, %s815
        %s817 = scalar_lea.smem [#allocation2], 1
        %818 = sst [smem:[%s817]] %s816
        %p819 = scmp.eq.s32.totalorder %s24, 1
        // Predicated region
        $region149: #{tpu_custom_call.1} parent=131 // pred_check
          %p820 = pneg %p819
        $region150: #{tpu_custom_call.1} parent=131 // pred_check_branch
          %822 = sbr.rel (%p820) target = $region152
        $region151: #{tpu_custom_call.1} parent=131 // pred_region
          %v823 = vlaneseq
          %v824 = vand.u32 %v823, 127
          %vm825 = vcmp.eq.s32.totalorder %v613, 0
          %vm826 = vcmp.eq.s32.totalorder %v824, 0
          %vm827 = vmand %vm825, %vm826
          %s828 = sld [smem:[#allocation2]]
          %v829 = vstv %s828
          %v830 = vsel %vm827, %v829, 0.0
          %vm831 = vcmp.eq.s32.totalorder %v824, 1
          %vm832 = vmand %vm825, %vm831
          %s833 = sld [smem:[#allocation2 + $0x1]]
          %v834 = vstv %s833
          %v835 = vsel %vm832, %v834, %v830
          %836 = vst [vmem:[%s571] sm:$0xff] %v835
        $region152: #{tpu_custom_call.1} parent=131 // pred_fallthru
          _
        %s837 = sand.u32 %s144, 1
        %s838 = scalar_lea.sflag [#allocation6], %s837
        %s839 = sand.u32 %s144, 1
        %s840 = smul.addr %s839, 8
        %s841 = scalar_lea.vmem [#allocation8], %s840
        // Predicated region
        $region153: #{tpu_custom_call.1} parent=131 // pred_check
          %p842 = pneg %p154
        $region154: #{tpu_custom_call.1} parent=131 // pred_check_branch
          %844 = sbr.rel (%p842) target = $region156
        $region155: #{tpu_custom_call.1} parent=131 // pred_region
          %s846 = ssub.s32 128, 128
          %847 = vsyncadd %s838, %s846
          %s848 = smul.addr %s23, 128
          %s849 = scalar_lea.hbm %s4, %s848
          %s851 = sshll.u32 %s841, 4
          %s852 = int_to_ptr.vmem [resolvable:$true] %s851
          %854 = dma.vmem_to_hbm [thread:$0]  %s852, 128, %s849, %s838
        $region156: #{tpu_custom_call.1} parent=131 // pred_fallthru
          _
      $region132: #{tpu_custom_call.1} parent=5 // pred_fallthru
        _
      %p855 = scmp.le.s32.totalorder 2, %s14
      // Predicated region
      $region157: #{tpu_custom_call.1} parent=5 // pred_check
        %p856 = pneg %p855
      $region158: #{tpu_custom_call.1} parent=5 // pred_check_branch
        %858 = sbr.rel (%p856) target = $region160
      $region159: #{tpu_custom_call.1} parent=5 // pred_region
        %s859 = ssub.s32 %s14, 2
        // Predicated region
        $region161: #{tpu_custom_call.1} parent=159 // pred_check
          %p860 = pneg %p160
        $region162: #{tpu_custom_call.1} parent=159 // pred_check_branch
          %862 = sbr.rel (%p860) target = $region164
        $region163: #{tpu_custom_call.1} parent=159 // pred_region
          %s863 = sand.u32 %s145, 1
          %s864 = scalar_lea.sflag [#allocation6], %s863
          %s865 = sand.u32 %s145, 1
          %s866 = smul.addr %s865, 8
          %s867 = scalar_lea.vmem [#allocation8], %s866
          %868 = dma.done %s864, 128
        $region164: #{tpu_custom_call.1} parent=159 // pred_fallthru
          _
      $region160: #{tpu_custom_call.1} parent=5 // pred_fallthru
        _
    $region6: #{tpu_custom_call.1} parent=1 // loop_footer
      %s18 = sadd.s32 1, %s14
    $region7: #{tpu_custom_call.1} parent=1 // loop_footer_branch
      %13 = sbr.rel target = $region3
    $region8: #{tpu_custom_call.1} parent=1 // loop_exit
      _
    %869 = vsyncpa [#allocation6], 1
    %s870 = scalar_lea.sflag [#allocation6], 1
    %871 = vsyncpa %s870, 1
    %872 = vsyncpa [#allocation7], 1
    %s873 = scalar_lea.sflag [#allocation7], 1
    %874 = vsyncpa %s873, 1

</llo_original>
